<compile_context>
chip_gen: v7x
topology: tpu7x:2x2x1
jax: 0.10.0
libtpu: 0.0.40
codegen_flags: <defaults>
</compile_context>

<pallas_src>
import functools

import numpy as np
import jax
import jax.numpy as jnp
from jax.experimental import pallas as pl
from jax.experimental.pallas import tpu as pltpu

_GELU_C = 0.7978845608028654  # sqrt(2/pi)


def _gelu_tanh(h):
    return 0.5 * h * (1.0 + jnp.tanh(_GELU_C * (h + 0.044715 * h * h * h)))


# ----------------------------- module glue (offline, numpy) -----------------

def _pick_groups(in_chs, out_chs):
    def _divisors(n):
        divs, i = [], 1
        while i * i <= n:
            if n % i == 0:
                divs.append(i)
                if i != n // i:
                    divs.append(n // i)
            i += 1
        return sorted(divs)

    best_g1, best_g2, best_cost = 1, in_chs, float("inf")
    for d in _divisors(in_chs):
        g1, g2 = d, in_chs // d
        cost = in_chs * in_chs / g1 + in_chs * out_chs / g2
        if cost < best_cost:
            best_cost, best_g1, best_g2 = cost, g1, g2
    return best_g1, best_g2


def _expand_grouped(w, in_chs, out_chs, groups):
    """PyTorch grouped 1x1 conv weight (out_chs, in_chs//groups) -> dense (in_chs, out_chs)."""
    in_pg = in_chs // groups
    out_pg = out_chs // groups
    W = np.zeros((in_chs, out_chs), dtype=np.float32)
    for g in range(groups):
        blk = w[g * out_pg:(g + 1) * out_pg, :]          # (out_pg, in_pg)
        W[g * in_pg:(g + 1) * in_pg, g * out_pg:(g + 1) * out_pg] = blk.T
    return W


def _shuffle_perm(in_chs, g1, g2):
    """new channel index of old channel idx for 'b (g1 g2) -> b (g2 g1)'."""
    idx = np.arange(in_chs)
    i1, i2 = idx // g2, idx % g2
    return i2 * g1 + i1


def make_params(channels, se_ratio, key):
    mid = int(channels * se_ratio)
    g1r, g2r = _pick_groups(channels, mid)      # conv_reduce groups
    g1e, g2e = _pick_groups(mid, channels)      # conv_expand groups
    ks = jax.random.split(key, 8)

    def init(k, shape, fan_in):
        bound = 1.0 / np.sqrt(fan_in)
        return np.asarray(jax.random.uniform(k, shape, jnp.float32, -bound, bound))

    # conv_reduce.conv1: Conv(C, C, 1, groups=g1r, bias=True)
    w_r1 = init(ks[0], (channels, channels // g1r), channels // g1r)
    b_r1 = init(ks[1], (channels,), channels // g1r)
    # conv_reduce.conv2: Conv(C, mid, 1, groups=g2r, bias=True)
    w_r2 = init(ks[2], (mid, channels // g2r), channels // g2r)
    b_r2 = init(ks[3], (mid,), channels // g2r)
    # conv_expand.conv1: Conv(mid, mid, 1, groups=g1e, bias=True)
    w_e1 = init(ks[4], (mid, mid // g1e), mid // g1e)
    b_e1 = init(ks[5], (mid,), mid // g1e)
    # conv_expand.conv2: Conv(mid, C, 1, groups=g2e, bias=True)
    w_e2 = init(ks[6], (channels, mid // g2e), mid // g2e)
    b_e2 = init(ks[7], (channels,), mid // g2e)

    raw = dict(w_r1=w_r1, b_r1=b_r1, w_r2=w_r2, b_r2=b_r2, g_r=(g1r, g2r),
               w_e1=w_e1, b_e1=b_e1, w_e2=w_e2, b_e2=b_e2, g_e=(g1e, g2e))

    # dense expansion + channel-shuffle fold (row permutation of the 2nd matrix)
    W1 = _expand_grouped(w_r1, channels, channels, g1r)
    W2 = _expand_grouped(w_r2, channels, mid, g2r)[_shuffle_perm(channels, g1r, g2r)]
    W3 = _expand_grouped(w_e1, mid, mid, g1e)
    W4 = _expand_grouped(w_e2, mid, channels, g2e)[_shuffle_perm(mid, g1e, g2e)]

    # fold back-to-back affine pairs (no nonlinearity in between) -> exact
    Wr = W1 @ W2                       # (C, mid): pooled -> mid
    br = b_r1 @ W2 + b_r2              # (mid,)
    We = W3 @ W4                       # (mid, C): mid -> gate
    be = b_e1 @ W4 + b_e2              # (C,)

    # orientation used by the kernels (channels on sublanes everywhere;
    # no in-kernel transposes / relayouts, no N=1 MXU matmuls)
    kernel_params = (jnp.asarray(Wr),                        # (C, mid)
                     jnp.asarray(br.reshape(1, mid)),        # (1, mid)
                     jnp.asarray(We.T),                      # (C, mid)
                     jnp.asarray(be.reshape(channels, 1)))   # (C, 1)
    return kernel_params, raw


# ------------------------------ Pallas kernels -------------------------------

def _fused_se_kernel(x_ref, wr_ref, br_ref, weT_ref, be_ref, o_ref, *, inv_spatial):
    """Single pass for one batch: x_ref/o_ref are the full (C, S) slab in VMEM."""
    x = x_ref[...]                                                    # (C, S)
    # global average pool: f32 lane-axis reduction -> (C, 1)
    pooled = jnp.sum(x.astype(jnp.float32), axis=-1, keepdims=True) * inv_spatial
    # folded conv_reduce: VPU broadcast-mul + sublane reduce (no 1-lane matmul)
    h = jnp.sum(wr_ref[...] * pooled, axis=0, keepdims=True) + br_ref[...]    # (1, mid)
    h = _gelu_tanh(h)                                                  # GELU (tanh approx)
    # folded conv_expand: VPU broadcast-mul + lane reduce
    g = jnp.sum(weT_ref[...] * h, axis=-1, keepdims=True) + be_ref[...]        # (C, 1)
    gate = 1.0 / (1.0 + jnp.exp(-g))                                   # sigmoid, f32
    # scale in the activation dtype (bf16 multiply on v6e/v7x; identity for f32)
    o_ref[...] = (x * gate.astype(x.dtype)).astype(o_ref.dtype)


def _pool_partial_kernel(x_ref, o_ref):
    """Fallback pass 1: partial spatial sums per chunk.  x_ref (B, C, tS) -> o_ref (B, C)."""
    o_ref[...] = jnp.sum(x_ref[...].astype(jnp.float32), axis=-1)


# ------------------------------ wrapper --------------------------------------

def _pick_spatial_tile(S128, row_bytes, max_block_bytes):
    """Largest multiple-of-128 divisor of S128 under a per-block VMEM budget."""
    cap = max(128, (max_block_bytes // max(row_bytes, 1)) // 128 * 128)
    best, t = 128, 128
    while t <= min(S128, cap):
        if S128 % t == 0:
            best = t
        t += 128
    return best


def factorized_se(x_bcs, params, *,
                  fused_slab_bytes=6 * 1024 * 1024,    # per-batch (C,S) slab budget
                  max_block_bytes=4 * 1024 * 1024,     # fallback pooling tile budget
                  vmem_limit_bytes=32 * 1024 * 1024,   # safe on v5e/v6e/v7x
                  spatial_tile=None):
    """SE forward on NCHW-native (B, C, S) activations (S = flattened spatial).

    Fused single-pass kernel (read-once/write-once) whenever C*S*itemsize fits
    the slab budget (x + out double-buffered ~ 4x slab < vmem_limit_bytes);
    otherwise: Pallas tiled pooling (partial sums, parallel spatial axis) +
    JAX gate math + XLA broadcast multiply.
    """
    B, C, S = x_bcs.shape
    Wr_cm, br_1m, WeT_cm, be_c1 = params
    mid = Wr_cm.shape[1]
    itemsize = x_bcs.dtype.itemsize

    # ---------------- fused single-pass path ----------------
    if C * S * itemsize <= fused_slab_bytes:
        def full(shape):
            return pl.BlockSpec(shape, lambda b: (0,) * len(shape))

        return pl.pallas_call(
            functools.partial(_fused_se_kernel, inv_spatial=1.0 / S),
            out_shape=jax.ShapeDtypeStruct((B, C, S), x_bcs.dtype),
            grid_spec=pltpu.PrefetchScalarGridSpec(
                num_scalar_prefetch=0,
                grid=(B,),
                in_specs=[
                    pl.BlockSpec((None, C, S), lambda b: (b, 0, 0)),   # (C, S) slab
                    full((C, mid)), full((1, mid)),                    # folded reduce
                    full((C, mid)), full((C, 1)),                      # folded expand
                ],
                out_specs=pl.BlockSpec((None, C, S), lambda b: (b, 0, 0)),
            ),
            compiler_params=pltpu.CompilerParams(
                dimension_semantics=("parallel",),
                vmem_limit_bytes=vmem_limit_bytes),
        )(x_bcs, Wr_cm, br_1m, WeT_cm, be_c1)

    # ---------------- fallback: tiled pooling + JAX gate + XLA scale ----------
    # Pad S to a multiple of 128 (zeros don't perturb the sum; mean uses true S)
    # so all pooling tiles are lane-dense and VMEM-bounded.
    if S % 128 != 0:
        S_pad = ((S + 127) // 128) * 128
        x_p = jnp.pad(x_bcs, ((0, 0), (0, 0), (0, S_pad - S)))
    else:
        S_pad, x_p = S, x_bcs

    # TODO(synk): for extremely large B*C the (B, C, 128) minimum tile may exceed
    # the block budget; split the batch axis into the grid in that regime.
    tS = spatial_tile if spatial_tile is not None else _pick_spatial_tile(
        S_pad, B * C * itemsize, max_block_bytes)
    assert S_pad % tS == 0, "spatial tile must divide the (padded) spatial size"
    n_s = S_pad // tS

    # Partial sums per spatial chunk over a single *parallel* grid axis so both
    # v7x TensorCores drive DMA even at B=1 (no carried accumulator).
    partial = pl.pallas_call(
        _pool_partial_kernel,
        out_shape=jax.ShapeDtypeStruct((n_s, B, C), jnp.float32),
        grid_spec=pltpu.PrefetchScalarGridSpec(
            num_scalar_prefetch=0,
            grid=(n_s,),
            in_specs=[pl.BlockSpec((B, C, tS), lambda s: (0, 0, s))],
            out_specs=pl.BlockSpec((None, B, C), lambda s: (s, 0, 0)),
        ),
        compiler_params=pltpu.CompilerParams(
            dimension_semantics=("parallel",),
            vmem_limit_bytes=vmem_limit_bytes),
    )(x_p)

    # Gate math in plain JAX at sane (B, C) matmul shapes, f32 throughout.
    pooled = jnp.sum(partial, axis=0) * (1.0 / S)                      # (B, C) mean
    h = jnp.dot(pooled, Wr_cm) + br_1m                                 # (B, mid)
    h = _gelu_tanh(h)
    g = jnp.einsum("bm,cm->bc", h, WeT_cm) + be_c1.reshape(1, C)       # (B, C)
    gate = jax.nn.sigmoid(g)

    # Scale: plain XLA broadcast multiply (HBM roofline; no aliasing pitfalls).
    return (x_bcs * gate[:, :, None].astype(x_bcs.dtype)).astype(x_bcs.dtype)


# ------------------------------ reference (numpy, unfolded) ------------------

def _grouped_conv1x1_ref(s, w, b, groups):
    B, cin = s.shape
    cout = w.shape[0]
    in_pg, out_pg = cin // groups, cout // groups
    out = np.zeros((B, cout), dtype=s.dtype)
    for g in range(groups):
        sg = s[:, g * in_pg:(g + 1) * in_pg]
        wg = w[g * out_pg:(g + 1) * out_pg].astype(s.dtype)
        out[:, g * out_pg:(g + 1) * out_pg] = sg @ wg.T
    return out + b.astype(s.dtype)[None, :]


def _shuffle_ref(s, g1, g2):
    B, c = s.shape
    return s.reshape(B, g1, g2).transpose(0, 2, 1).reshape(B, c)


def reference_forward(x_bcs, raw):
    """Directly mirrors the PyTorch module (grouped convs + shuffle), in f64."""
    x = np.asarray(x_bcs, dtype=np.float64)                  # (B, C, S)
    s = x.mean(axis=-1)                                      # adaptive avg pool -> (B, C)
    g1r, g2r = raw["g_r"]
    g1e, g2e = raw["g_e"]
    s = _grouped_conv1x1_ref(s, raw["w_r1"], raw["b_r1"], g1r)
    s = _shuffle_ref(s, g1r, g2r)
    s = _grouped_conv1x1_ref(s, raw["w_r2"], raw["b_r2"], g2r)
    s = 0.5 * s * (1.0 + np.tanh(_GELU_C * (s + 0.044715 * s ** 3)))   # GELU (tanh)
    s = _grouped_conv1x1_ref(s, raw["w_e1"], raw["b_e1"], g1e)
    s = _shuffle_ref(s, g1e, g2e)
    s = _grouped_conv1x1_ref(s, raw["w_e2"], raw["b_e2"], g2e)
    gate = 1.0 / (1.0 + np.exp(-s))                                    # sigmoid
    return x * gate[:, :, None]


# --------------------------------- main ---------------------------------------

if __name__ == "__main__":
    key = jax.random.PRNGKey(0)

    configs = [
        # (B, C, H, W, se_ratio, force_fallback, spatial_tile)
        (2, 16, 16, 16, 0.25, False, None),   # fused single-pass path (S=256 slab)
        (2, 16, 16, 16, 0.25, True, 128),     # fallback: 2 spatial chunks, partial sums
        (1, 8, 6, 6, 0.25, False, None),      # fused, S=36 non-128 full-extent slab
        (1, 8, 6, 6, 0.25, True, None),       # fallback with zero-padding S 36 -> 128
    ]
    for (B, C, H, W, ratio, force_fb, tile) in configs:
        kx, kp, key = jax.random.split(key, 3)
        x_nchw = jax.random.normal(kx, (B, C, H, W), jnp.float32)
        x_bcs = x_nchw.reshape(B, C, H * W)       # free reshape: NCHW-native layout

        kparams, raw = make_params(C, ratio, kp)
        ref = reference_forward(np.asarray(x_bcs), raw)   # gold, before the kernel runs

        out = factorized_se(
            x_bcs, kparams,
            fused_slab_bytes=0 if force_fb else 6 * 1024 * 1024,
            spatial_tile=tile)
        out = jax.block_until_ready(out)
        np.testing.assert_allclose(np.asarray(out), ref, rtol=1e-5, atol=1e-5)

    print("KERNEL_OK")
</pallas_src>

<mosaic_0001>
module attributes {stable_mosaic.version = 11 : i64} {
  func.func @_fused_se_kernel(%arg0: i32, %arg1: memref<1x16x256xf32, #tpu.memory_space<vmem>>, %arg2: memref<16x4xf32, #tpu.memory_space<vmem>>, %arg3: memref<1x4xf32, #tpu.memory_space<vmem>>, %arg4: memref<16x4xf32, #tpu.memory_space<vmem>>, %arg5: memref<16x1xf32, #tpu.memory_space<vmem>>, %arg6: memref<1x16x256xf32, #tpu.memory_space<vmem>>) attributes {dimension_semantics = [#tpu.dimension_semantics<parallel>], iteration_bounds = array<i64: 2>, scalar_prefetch = 0 : i64, scratch_operands = 0 : i64, tpu.core_type = #tpu.core_type<tc>, window_params = [{transform_indices = @transform_0, window_bounds = array<i64: 1, 16, 256>}, {pipeline_mode = #tpu.pipeline_mode<synchronous>, transform_indices = @transform_1, window_bounds = array<i64: 16, 4>}, {pipeline_mode = #tpu.pipeline_mode<synchronous>, transform_indices = @transform_2, window_bounds = array<i64: 1, 4>}, {pipeline_mode = #tpu.pipeline_mode<synchronous>, transform_indices = @transform_3, window_bounds = array<i64: 16, 4>}, {pipeline_mode = #tpu.pipeline_mode<synchronous>, transform_indices = @transform_4, window_bounds = array<i64: 16, 1>}, {transform_indices = @transform_5, window_bounds = array<i64: 1, 16, 256>}]} {
    %c0 = arith.constant 0 : index
    %c0_0 = arith.constant 0 : index
    %c0_1 = arith.constant 0 : index
    %0 = vector.load %arg1[%c0, %c0_0, %c0_1] : memref<1x16x256xf32, #tpu.memory_space<vmem>>, vector<1x16x256xf32>
    %1 = vector.shape_cast %0 : vector<1x16x256xf32> to vector<16x256xf32>
    %cst = arith.constant dense<0.000000e+00> : vector<16xf32>
    %2 = vector.multi_reduction <add>, %1, %cst [1] : vector<16x256xf32> to vector<16xf32>
    %3 = vector.shape_cast %2 : vector<16xf32> to vector<16x1xf32>
    %cst_2 = arith.constant 3.906250e-03 : f32
    %4 = vector.broadcast %cst_2 : f32 to vector<16x1xf32>
    %5 = arith.mulf %3, %4 : vector<16x1xf32>
    %c0_3 = arith.constant 0 : index
    %c0_4 = arith.constant 0 : index
    %6 = vector.load %arg2[%c0_3, %c0_4] : memref<16x4xf32, #tpu.memory_space<vmem>>, vector<16x4xf32>
    %7 = vector.broadcast %5 : vector<16x1xf32> to vector<16x4xf32>
    %8 = arith.mulf %6, %7 : vector<16x4xf32>
    %cst_5 = arith.constant dense<0.000000e+00> : vector<4xf32>
    %9 = vector.multi_reduction <add>, %8, %cst_5 [0] : vector<16x4xf32> to vector<4xf32>
    %10 = vector.shape_cast %9 : vector<4xf32> to vector<1x4xf32>
    %c0_6 = arith.constant 0 : index
    %c0_7 = arith.constant 0 : index
    %11 = vector.load %arg3[%c0_6, %c0_7] : memref<1x4xf32, #tpu.memory_space<vmem>>, vector<1x4xf32>
    %12 = arith.addf %10, %11 : vector<1x4xf32>
    %cst_8 = arith.constant 5.000000e-01 : f32
    %13 = vector.broadcast %cst_8 : f32 to vector<1x4xf32>
    %14 = arith.mulf %13, %12 : vector<1x4xf32>
    %cst_9 = arith.constant 4.471500e-02 : f32
    %15 = vector.broadcast %cst_9 : f32 to vector<1x4xf32>
    %16 = arith.mulf %15, %12 : vector<1x4xf32>
    %17 = arith.mulf %16, %12 : vector<1x4xf32>
    %18 = arith.mulf %17, %12 : vector<1x4xf32>
    %19 = arith.addf %12, %18 : vector<1x4xf32>
    %cst_10 = arith.constant 0.797884583 : f32
    %20 = vector.broadcast %cst_10 : f32 to vector<1x4xf32>
    %21 = arith.mulf %20, %19 : vector<1x4xf32>
    %22 = math.tanh %21 : vector<1x4xf32>
    %cst_11 = arith.constant 1.000000e+00 : f32
    %23 = vector.broadcast %cst_11 : f32 to vector<1x4xf32>
    %24 = arith.addf %23, %22 : vector<1x4xf32>
    %25 = arith.mulf %14, %24 : vector<1x4xf32>
    %c0_12 = arith.constant 0 : index
    %c0_13 = arith.constant 0 : index
    %26 = vector.load %arg4[%c0_12, %c0_13] : memref<16x4xf32, #tpu.memory_space<vmem>>, vector<16x4xf32>
    %27 = vector.broadcast %25 : vector<1x4xf32> to vector<16x4xf32>
    %28 = arith.mulf %26, %27 : vector<16x4xf32>
    %cst_14 = arith.constant dense<0.000000e+00> : vector<16xf32>
    %29 = vector.multi_reduction <add>, %28, %cst_14 [1] : vector<16x4xf32> to vector<16xf32>
    %30 = vector.shape_cast %29 : vector<16xf32> to vector<16x1xf32>
    %c0_15 = arith.constant 0 : index
    %c0_16 = arith.constant 0 : index
    %31 = vector.load %arg5[%c0_15, %c0_16] : memref<16x1xf32, #tpu.memory_space<vmem>>, vector<16x1xf32>
    %32 = arith.addf %30, %31 : vector<16x1xf32>
    %cst_17 = arith.constant 0.000000e+00 : f32
    %33 = vector.broadcast %cst_17 : f32 to vector<16x1xf32>
    %34 = arith.subf %33, %32 : vector<16x1xf32>
    %35 = math.exp %34 : vector<16x1xf32>
    %cst_18 = arith.constant 1.000000e+00 : f32
    %36 = vector.broadcast %cst_18 : f32 to vector<16x1xf32>
    %37 = arith.addf %36, %35 : vector<16x1xf32>
    %cst_19 = arith.constant 1.000000e+00 : f32
    %38 = vector.broadcast %cst_19 : f32 to vector<16x1xf32>
    %39 = arith.divf %38, %37 : vector<16x1xf32>
    %40 = vector.broadcast %39 : vector<16x1xf32> to vector<16x256xf32>
    %41 = arith.mulf %1, %40 : vector<16x256xf32>
    %c0_20 = arith.constant 0 : index
    %c0_21 = arith.constant 0 : index
    %c0_22 = arith.constant 0 : index
    %42 = vector.load %arg6[%c0_20, %c0_21, %c0_22] : memref<1x16x256xf32, #tpu.memory_space<vmem>>, vector<1x16x256xf32>
    %43 = vector.shape_cast %42 : vector<1x16x256xf32> to vector<16x256xf32>
    %44 = vector.shape_cast %41 : vector<16x256xf32> to vector<1x16x256xf32>
    tpu.vector_store %arg6[%c0_20, %c0_21, %c0_22], %44 {strides = array<i32>} : memref<1x16x256xf32, #tpu.memory_space<vmem>>, vector<1x16x256xf32>,
    return
  }
  func.func @transform_0(%arg0: i32) -> (i32, i32, i32) {
    %c0_i32 = arith.constant 0 : i32
    %c0_i32_0 = arith.constant 0 : i32
    %c0_i32_1 = arith.constant 0 : i32
    return %arg0, %c0_i32, %c0_i32_0 : i32, i32, i32
  }
  func.func @transform_1(%arg0: i32) -> (i32, i32) {
    %c0_i32 = arith.constant 0 : i32
    %c0_i32_0 = arith.constant 0 : i32
    %c0_i32_1 = arith.constant 0 : i32
    return %c0_i32, %c0_i32_0 : i32, i32
  }
  func.func @transform_2(%arg0: i32) -> (i32, i32) {
    %c0_i32 = arith.constant 0 : i32
    %c0_i32_0 = arith.constant 0 : i32
    %c0_i32_1 = arith.constant 0 : i32
    return %c0_i32, %c0_i32_0 : i32, i32
  }
  func.func @transform_3(%arg0: i32) -> (i32, i32) {
    %c0_i32 = arith.constant 0 : i32
    %c0_i32_0 = arith.constant 0 : i32
    %c0_i32_1 = arith.constant 0 : i32
    return %c0_i32, %c0_i32_0 : i32, i32
  }
  func.func @transform_4(%arg0: i32) -> (i32, i32) {
    %c0_i32 = arith.constant 0 : i32
    %c0_i32_0 = arith.constant 0 : i32
    %c0_i32_1 = arith.constant 0 : i32
    return %c0_i32, %c0_i32_0 : i32, i32
  }
  func.func @transform_5(%arg0: i32) -> (i32, i32, i32) {
    %c0_i32 = arith.constant 0 : i32
    %c0_i32_0 = arith.constant 0 : i32
    %c0_i32_1 = arith.constant 0 : i32
    return %arg0, %c0_i32, %c0_i32_0 : i32, i32, i32
  }
}

</mosaic_0001>

<llo_original>
// kernel: tpu_custom_call.1
$region0: #{tpu_custom_call.1}
  #allocation0 [shape = 'u32[]', space=smem, size = 0x4, offset = 0x4, fixed_abs, tag = 'smem constant byte address 0x4 - core index']
  #allocation1 [shape = 'u32[144,128]{1,0:T(1,128)}', space=vmem, size = 0x12000, scoped, tag = 'internal scratch']
  %s0 = inlined_call_operand.hbm [shape: f32[2,16,256], index: 0, kind: input, shape index: {}]
  %s1 = inlined_call_operand.vmem [shape: f32[16,4], index: 1, kind: input, shape index: {}]
  %s2 = inlined_call_operand.vmem [shape: f32[1,4], index: 2, kind: input, shape index: {}]
  %s3 = inlined_call_operand.vmem [shape: f32[16,4], index: 3, kind: input, shape index: {}]
  %s4 = inlined_call_operand.vmem [shape: f32[16,1], index: 4, kind: input, shape index: {}]
  %s5 = inlined_call_operand.hbm [shape: f32[2,16,256], index: 5, kind: output, shape index: {}]
  %s6 = sld [smem:[#allocation0]]
  $region57: #{tpu_custom_call.1} parent=0
    _
  %s8 = ssub.s32 1, %s6
  %s9 = scalar_select 0, %s8, %s6
  $region1: #{tpu_custom_call.1} parent=0
    #allocation2 [shape = 'u8[32768]{0}', space=vmem, size = 0x8000, scoped, tag = 'input window, operand 0']
    #allocation3 [shape = 's32[2]{0}', space=sflag, size = 0x8, scoped, tag = 'scoped memory for tpu_custom_call.1']
    #allocation4 [shape = 's32[2]{0}', space=sflag, size = 0x8, scoped, tag = 'scoped memory for tpu_custom_call.1']
    #allocation5 [shape = 'u8[32768]{0}', space=vmem, size = 0x8000, scoped, tag = 'output window, operand 0']
    %10 = vsyncpa [#allocation3], 0
    %s11 = scalar_lea.sflag [#allocation3], 1
    %12 = vsyncpa %s11, 0
    %13 = vsyncpa [#allocation4], 0
    %s14 = scalar_lea.sflag [#allocation4], 1
    %15 = vsyncpa %s14, 0
    loop: start=0, step=1, limit=4
    $region2: #{tpu_custom_call.1} parent=1 // loop_pre_header
      _
    $region3: #{tpu_custom_call.1} parent=1 // loop_header
      %s17 = sphi 0, %s21
      %p18 = scmp.ge.s32.totalorder %s17, 4
      %s27 = sphi 0, %s29
      %s30 = sphi 0, %s27
      %s31 = sphi 0, %s30
      %s47 = sphi 0, %s31
      %s51 = sphi 0, %s51
      %s53 = sphi 0, %s51
      %s54 = sphi 0, %s53
      %s68 = sphi 0, %s54
      %s72 = sphi 0, %s72
      %s74 = sphi 0, %s72
      %s75 = sphi 0, %s74
      %s89 = sphi 0, %s75
      %s93 = sphi 0, %s93
      %s95 = sphi 0, %s93
      %s96 = sphi 0, %s95
      %s110 = sphi 0, %s96
      %s114 = sphi 0, %s114
      %s116 = sphi 0, %s114
      %s117 = sphi 0, %s116
      %s131 = sphi 0, %s117
      %s137 = sphi 0, %s139
      %s140 = sphi 0, %s137
      %s141 = sphi 0, %s140
      %s157 = sphi 0, %s141
    $region4: #{tpu_custom_call.1} parent=1 // loop_header_branch
      %20 = sbr.rel (%p18) target = $region8
    $region5: #{tpu_custom_call.1} parent=1 // loop_body
      %s22 = ssub.s32 %s17, 1
      %s23 = ssub.s32 %s17, 2
      %s24 = sadd.s32 %s17, 1
      %s25 = ssub.s32 %s17, %s24
      %p26 = scmp.eq.s32.totalorder %s25, 0
      %s28 = sadd.s32 %s27, 1
      %s29 = scalar_select %p26, %s27, %s28
      %p32 = pneg %p26
      %p33 = scmp.eq.s32.totalorder %s17, 1
      %p34 = por %p32, %p33
      %p35 = scmp.ne.s32.totalorder %s27, %s30
      %p36 = scmp.eq.s32.totalorder %s17, 0
      %p37 = por %p35, %p36
      %p38 = scmp.ne.s32.totalorder %s27, %s30
      %p39 = scmp.eq.s32.totalorder %s22, 1
      %p40 = por %p38, %p39
      %p41 = scmp.ne.s32.totalorder %s30, %s31
      %p42 = scmp.eq.s32.totalorder %s22, 0
      %p43 = por %p41, %p42
      %p44 = scmp.ne.s32.totalorder %s30, %s31
      %p45 = scmp.eq.s32.totalorder %s23, 1
      %p46 = por %p44, %p45
      %p48 = scmp.ne.s32.totalorder %s31, %s47
      %p49 = scmp.eq.s32.totalorder %s23, 0
      %p50 = por %p48, %p49
      %s52 = sadd.s32 %s51, 1
      %p55 = scmp.eq.s32.totalorder %s17, 1
      %p56 = scmp.ne.s32.totalorder %s51, %s53
      %p57 = scmp.eq.s32.totalorder %s17, 0
      %p58 = por %p56, %p57
      %p59 = scmp.ne.s32.totalorder %s51, %s53
      %p60 = scmp.eq.s32.totalorder %s22, 1
      %p61 = por %p59, %p60
      %p62 = scmp.ne.s32.totalorder %s53, %s54
      %p63 = scmp.eq.s32.totalorder %s22, 0
      %p64 = por %p62, %p63
      %p65 = scmp.ne.s32.totalorder %s53, %s54
      %p66 = scmp.eq.s32.totalorder %s23, 1
      %p67 = por %p65, %p66
      %p69 = scmp.ne.s32.totalorder %s54, %s68
      %p70 = scmp.eq.s32.totalorder %s23, 0
      %p71 = por %p69, %p70
      %s73 = sadd.s32 %s72, 1
      %p76 = scmp.eq.s32.totalorder %s17, 1
      %p77 = scmp.ne.s32.totalorder %s72, %s74
      %p78 = scmp.eq.s32.totalorder %s17, 0
      %p79 = por %p77, %p78
      %p80 = scmp.ne.s32.totalorder %s72, %s74
      %p81 = scmp.eq.s32.totalorder %s22, 1
      %p82 = por %p80, %p81
      %p83 = scmp.ne.s32.totalorder %s74, %s75
      %p84 = scmp.eq.s32.totalorder %s22, 0
      %p85 = por %p83, %p84
      %p86 = scmp.ne.s32.totalorder %s74, %s75
      %p87 = scmp.eq.s32.totalorder %s23, 1
      %p88 = por %p86, %p87
      %p90 = scmp.ne.s32.totalorder %s75, %s89
      %p91 = scmp.eq.s32.totalorder %s23, 0
      %p92 = por %p90, %p91
      %s94 = sadd.s32 %s93, 1
      %p97 = scmp.eq.s32.totalorder %s17, 1
      %p98 = scmp.ne.s32.totalorder %s93, %s95
      %p99 = scmp.eq.s32.totalorder %s17, 0
      %p100 = por %p98, %p99
      %p101 = scmp.ne.s32.totalorder %s93, %s95
      %p102 = scmp.eq.s32.totalorder %s22, 1
      %p103 = por %p101, %p102
      %p104 = scmp.ne.s32.totalorder %s95, %s96
      %p105 = scmp.eq.s32.totalorder %s22, 0
      %p106 = por %p104, %p105
      %p107 = scmp.ne.s32.totalorder %s95, %s96
      %p108 = scmp.eq.s32.totalorder %s23, 1
      %p109 = por %p107, %p108
      %p111 = scmp.ne.s32.totalorder %s96, %s110
      %p112 = scmp.eq.s32.totalorder %s23, 0
      %p113 = por %p111, %p112
      %s115 = sadd.s32 %s114, 1
      %p118 = scmp.eq.s32.totalorder %s17, 1
      %p119 = scmp.ne.s32.totalorder %s114, %s116
      %p120 = scmp.eq.s32.totalorder %s17, 0
      %p121 = por %p119, %p120
      %p122 = scmp.ne.s32.totalorder %s114, %s116
      %p123 = scmp.eq.s32.totalorder %s22, 1
      %p124 = por %p122, %p123
      %p125 = scmp.ne.s32.totalorder %s116, %s117
      %p126 = scmp.eq.s32.totalorder %s22, 0
      %p127 = por %p125, %p126
      %p128 = scmp.ne.s32.totalorder %s116, %s117
      %p129 = scmp.eq.s32.totalorder %s23, 1
      %p130 = por %p128, %p129
      %p132 = scmp.ne.s32.totalorder %s117, %s131
      %p133 = scmp.eq.s32.totalorder %s23, 0
      %p134 = por %p132, %p133
      %s135 = ssub.s32 %s17, %s24
      %p136 = scmp.eq.s32.totalorder %s135, 0
      %s138 = sadd.s32 %s137, 1
      %s139 = scalar_select %p136, %s137, %s138
      %p142 = pneg %p136
      %p143 = scmp.eq.s32.totalorder %s17, 1
      %p144 = por %p142, %p143
      %p145 = scmp.ne.s32.totalorder %s137, %s140
      %p146 = scmp.eq.s32.totalorder %s17, 0
      %p147 = por %p145, %p146
      %p148 = scmp.ne.s32.totalorder %s137, %s140
      %p149 = scmp.eq.s32.totalorder %s22, 1
      %p150 = por %p148, %p149
      %p151 = scmp.ne.s32.totalorder %s140, %s141
      %p152 = scmp.eq.s32.totalorder %s22, 0
      %p153 = por %p151, %p152
      %p154 = scmp.ne.s32.totalorder %s140, %s141
      %p155 = scmp.eq.s32.totalorder %s23, 1
      %p156 = por %p154, %p155
      %p158 = scmp.ne.s32.totalorder %s141, %s157
      %p159 = scmp.eq.s32.totalorder %s23, 0
      %p160 = por %p158, %p159
      %p161 = scmp.le.s32.totalorder 1, %s17
      %p162 = scmp.lt.s32.totalorder %s17, 3
      %p163 = pnand %p161, %p162
      %p164 = pneg %p163
      // Predicated region
      $region9: #{tpu_custom_call.1} parent=5 // pred_check
        _
      $region10: #{tpu_custom_call.1} parent=5 // pred_check_branch
        %166 = sbr.rel (%p163) target = $region12
      $region11: #{tpu_custom_call.1} parent=5 // pred_region
        %s167 = ssub.s32 %s17, 1
        // Predicated region
        $region13: #{tpu_custom_call.1} parent=11 // pred_check
          %p168 = pneg %p64
        $region14: #{tpu_custom_call.1} parent=11 // pred_check_branch
          %170 = sbr.rel (%p168) target = $region16
        $region15: #{tpu_custom_call.1} parent=11 // pred_region
          _
        $region16: #{tpu_custom_call.1} parent=11 // pred_fallthru
          _
        // Predicated region
        $region17: #{tpu_custom_call.1} parent=11 // pred_check
          %p171 = pneg %p85
        $region18: #{tpu_custom_call.1} parent=11 // pred_check_branch
          %173 = sbr.rel (%p171) target = $region20
        $region19: #{tpu_custom_call.1} parent=11 // pred_region
          _
        $region20: #{tpu_custom_call.1} parent=11 // pred_fallthru
          _
        // Predicated region
        $region21: #{tpu_custom_call.1} parent=11 // pred_check
          %p174 = pneg %p106
        $region22: #{tpu_custom_call.1} parent=11 // pred_check_branch
          %176 = sbr.rel (%p174) target = $region24
        $region23: #{tpu_custom_call.1} parent=11 // pred_region
          _
        $region24: #{tpu_custom_call.1} parent=11 // pred_fallthru
          _
        // Predicated region
        $region25: #{tpu_custom_call.1} parent=11 // pred_check
          %p177 = pneg %p127
        $region26: #{tpu_custom_call.1} parent=11 // pred_check_branch
          %179 = sbr.rel (%p177) target = $region28
        $region27: #{tpu_custom_call.1} parent=11 // pred_region
          _
        $region28: #{tpu_custom_call.1} parent=11 // pred_fallthru
          _
      $region12: #{tpu_custom_call.1} parent=5 // pred_fallthru
        _
      %p180 = scmp.lt.s32.totalorder %s17, 2
      // Predicated region
      $region29: #{tpu_custom_call.1} parent=5 // pred_check
        %p181 = pneg %p180
      $region30: #{tpu_custom_call.1} parent=5 // pred_check_branch
        %183 = sbr.rel (%p181) target = $region32
      $region31: #{tpu_custom_call.1} parent=5 // pred_region
        // Predicated region
        $region33: #{tpu_custom_call.1} parent=31 // pred_check
          %p184 = pneg %p37
        $region34: #{tpu_custom_call.1} parent=31 // pred_check_branch
          %186 = sbr.rel (%p184) target = $region36
        $region35: #{tpu_custom_call.1} parent=31 // pred_region
          %s187 = sand.u32 %s27, 1
          %s188 = scalar_lea.sflag [#allocation3], %s187
          %s189 = sand.u32 %s27, 1
          %s190 = smul.addr %s189, 32
          %s191 = scalar_lea.vmem [#allocation2], %s190
          %s193 = ssub.s32 512, 512
          %194 = vsyncadd %s188, %s193
          %s195 = smul.addr %s17, 4
          %s196 = smul.addr %s195, 128
          %s197 = scalar_lea.hbm %s0, %s196
          %s198 = sshll.u32 %s191, 4
          %s199 = int_to_ptr.vmem [resolvable:$true] %s198
          %204 = dma.hbm_to_vmem [thread:$0]  %s197, 512, %s199, %s188, 256, 256, 16
        $region36: #{tpu_custom_call.1} parent=31 // pred_fallthru
          _
      $region32: #{tpu_custom_call.1} parent=5 // pred_fallthru
        _
      %p205 = scmp.le.s32.totalorder 1, %s17
      %p206 = scmp.lt.s32.totalorder %s17, 3
      %p207 = pnand %p205, %p206
      %p208 = pneg %p207
      // Predicated region
      $region37: #{tpu_custom_call.1} parent=5 // pred_check
        _
      $region38: #{tpu_custom_call.1} parent=5 // pred_check_branch
        %210 = sbr.rel (%p207) target = $region40
      $region39: #{tpu_custom_call.1} parent=5 // pred_region
        %s211 = ssub.s32 %s17, 1
        %s212 = sand.u32 %s30, 1
        %s213 = scalar_lea.sflag [#allocation3], %s212
        %s214 = sand.u32 %s30, 1
        %s215 = smul.addr %s214, 32
        %s216 = scalar_lea.vmem [#allocation2], %s215
        // Predicated region
        $region41: #{tpu_custom_call.1} parent=39 // pred_check
          %p217 = pneg %p43
        $region42: #{tpu_custom_call.1} parent=39 // pred_check_branch
          %219 = sbr.rel (%p217) target = $region44
        $region43: #{tpu_custom_call.1} parent=39 // pred_region
          %220 = dma.done %s213, 512
        $region44: #{tpu_custom_call.1} parent=39 // pred_fallthru
          _
        %s221 = sand.u32 %s30, 1
        %s222 = scalar_lea.sflag [#allocation3], %s221
        %s223 = sand.u32 %s30, 1
        %s224 = smul.addr %s223, 32
        %s225 = scalar_lea.vmem [#allocation2], %s224
        %p226 = pneg %p43
        %p227 = pneg %p40
        %p228 = pneg %p64
        %p229 = pneg %p61
        %p230 = pneg %p85
        %p231 = pneg %p82
        %p232 = pneg %p106
        %p233 = pneg %p103
        %p234 = pneg %p127
        %p235 = pneg %p124
        %p236 = pneg %p153
        %p237 = pneg %p150
        %s238 = sand.u32 %s140, 1
        %s239 = scalar_lea.sflag [#allocation4], %s238
        %s240 = sand.u32 %s140, 1
        %s241 = smul.addr %s240, 32
        %s242 = scalar_lea.vmem [#allocation5], %s241
        %v243 = vld [vmem:[%s216] sm:$0xff]
        %v244 = vld [vmem:[%s216 + $0x8] sm:$0xff]
        %v245 = vld [vmem:[%s216 + $0x10] sm:$0xff]
        %v246 = vld [vmem:[%s216 + $0x18] sm:$0xff]
        %v247 = vadd.f32 %v243, %v244
        %248 = vadd.xlane.f32.xlu0 %v247
        %v249 = vpop.xlane.xlu0 %248
        %v250 = vadd.f32 %v245, %v246
        %251 = vadd.xlane.f32.xlu0 %v250
        %v252 = vpop.xlane.xlu0 %251
        %v253 = vmul.f32 %v249, 0.00390625
        %v254 = vmul.f32 %v252, 0.00390625
        %v255 = vld [vmem:[%s1] sm:$0xff]
        %v256 = vld [vmem:[%s1 + $0x8] sm:$0xff]
        %v257 = vmul.f32 %v255, %v253
        %v258 = vmul.f32 %v256, %v254
        %vm259 = vcmask 31744
        %v260 = vsel %vm259, %v257, 0.0
        %v261 = vsel %vm259, %v258, 0.0
        %v262 = vadd.f32 %v260, %v261
        %v263 = vrot.slane %v262, 4
        %v264 = vadd.f32 %v262, %v263
        %v265 = vrot.slane %v264, 2
        %v266 = vadd.f32 %v264, %v265
        %v267 = vrot.slane %v266, 1
        %v268 = vadd.f32 %v266, %v267
        %v269 = vld [vmem:[%s2] sm:$0x1]
        %v270 = vadd.f32 %v268, %v269
        %v271 = vmul.f32 %v270, 0.5
        %v272 = vmul.f32 %v270, 0.044715
        %v273 = vmul.f32 %v272, %v270
        %v274 = vmul.f32 %v273, %v270
        %v275 = vadd.f32 %v270, %v274
        %v276 = vmul.f32 %v275, 0.7978846
        %v277 = vtanh.pop %v276
        %v278 = vadd.f32 %v277, 1.0
        %v279 = vmul.f32 %v271, %v278
        %v280 = vld [vmem:[%s3] sm:$0xff]
        %v281 = vld [vmem:[%s3 + $0x8] sm:$0xff]
        %v282 = vlaneseq
        %v283 = vshrl.u32 %v282, 7
        %v284 = vsub.s32 0, %v283
        %v285 = vrot.slane %v279, %v284
        %v286 = vmul.f32 %v280, %v285
        %v287 = vmul.f32 %v281, %v285
        %v288 = vsel %vm259, %v286, 0.0
        %289 = vadd.xlane.f32.xlu0 %v288
        %v290 = vpop.xlane.xlu0 %289
        %v291 = vsel %vm259, %v287, 0.0
        %292 = vadd.xlane.f32.xlu0 %v291
        %v293 = vpop.xlane.xlu0 %292
        %v294 = vld [vmem:[%s4] sm:$0xff]
        %v295 = vld [vmem:[%s4 + $0x8] sm:$0xff]
        %v296 = vadd.f32 %v290, %v294
        %v297 = vadd.f32 %v293, %v295
        %v298 = vsub.f32 0.0, %v296
        %v299 = vsub.f32 0.0, %v297
        %v300 = vmul.f32 %v298, 1.442695
        %v301 = vpow.pop %v300
        %v302 = vmul.f32 %v299, 1.442695
        %v303 = vpow.pop %v302
        %v304 = vadd.f32 %v301, 1.0
        %v305 = vadd.f32 %v303, 1.0
        %v306 = vrcp.pop %v304
        %v307 = vmul.f32 1.0, %v306
        %v308 = vrcp.pop %v305
        %v309 = vmul.f32 1.0, %v308
        %311 = vset.pattern.permute.xlu0 0
        %312 = vperm.xlu0 %311, %v307
        %v313 = vpop.permute.xlu0 %312
        %316 = vset.pattern.permute.xlu0 0
        %317 = vperm.xlu0 %316, %v309
        %v318 = vpop.permute.xlu0 %317
        %v320 = vmul.f32 %v243, %v313
        %v321 = vmul.f32 %v244, %v313
        %v322 = vmul.f32 %v245, %v318
        %v323 = vmul.f32 %v246, %v318
        %324 = vst [vmem:[%s242] sm:$0xff] %v320
        %325 = vst [vmem:[%s242 + $0x8] sm:$0xff] %v321
        %326 = vst [vmem:[%s242 + $0x10] sm:$0xff] %v322
        %327 = vst [vmem:[%s242 + $0x18] sm:$0xff] %v323
        %s328 = sand.u32 %s140, 1
        %s329 = scalar_lea.sflag [#allocation4], %s328
        %s330 = sand.u32 %s140, 1
        %s331 = smul.addr %s330, 32
        %s332 = scalar_lea.vmem [#allocation5], %s331
        // Predicated region
        $region45: #{tpu_custom_call.1} parent=39 // pred_check
          %p333 = pneg %p150
        $region46: #{tpu_custom_call.1} parent=39 // pred_check_branch
          %335 = sbr.rel (%p333) target = $region48
        $region47: #{tpu_custom_call.1} parent=39 // pred_region
          %s337 = ssub.s32 512, 512
          %338 = vsyncadd %s329, %s337
          %s339 = smul.addr %s22, 4
          %s340 = smul.addr %s339, 128
          %s341 = scalar_lea.hbm %s5, %s340
          %s342 = sshll.u32 %s332, 4
          %s343 = int_to_ptr.vmem [resolvable:$true] %s342
          %348 = dma.vmem_to_hbm [thread:$0]  %s343, 512, %s341, %s329, 256, 256, 16
        $region48: #{tpu_custom_call.1} parent=39 // pred_fallthru
          _
      $region40: #{tpu_custom_call.1} parent=5 // pred_fallthru
        _
      %p349 = scmp.le.s32.totalorder 2, %s17
      // Predicated region
      $region49: #{tpu_custom_call.1} parent=5 // pred_check
        %p350 = pneg %p349
      $region50: #{tpu_custom_call.1} parent=5 // pred_check_branch
        %352 = sbr.rel (%p350) target = $region52
      $region51: #{tpu_custom_call.1} parent=5 // pred_region
        %s353 = ssub.s32 %s17, 2
        // Predicated region
        $region53: #{tpu_custom_call.1} parent=51 // pred_check
          %p354 = pneg %p156
        $region54: #{tpu_custom_call.1} parent=51 // pred_check_branch
          %356 = sbr.rel (%p354) target = $region56
        $region55: #{tpu_custom_call.1} parent=51 // pred_region
          %s357 = sand.u32 %s141, 1
          %s358 = scalar_lea.sflag [#allocation4], %s357
          %s359 = sand.u32 %s141, 1
          %s360 = smul.addr %s359, 32
          %s361 = scalar_lea.vmem [#allocation5], %s360
          %362 = dma.done %s358, 512
        $region56: #{tpu_custom_call.1} parent=51 // pred_fallthru
          _
      $region52: #{tpu_custom_call.1} parent=5 // pred_fallthru
        _
    $region6: #{tpu_custom_call.1} parent=1 // loop_footer
      %s21 = sadd.s32 1, %s17
    $region7: #{tpu_custom_call.1} parent=1 // loop_footer_branch
      %16 = sbr.rel target = $region3
    $region8: #{tpu_custom_call.1} parent=1 // loop_exit
      _
    %363 = vsyncpa [#allocation3], 1
    %s364 = scalar_lea.sflag [#allocation3], 1
    %365 = vsyncpa %s364, 1
    %366 = vsyncpa [#allocation4], 1
    %s367 = scalar_lea.sflag [#allocation4], 1
    %368 = vsyncpa %s367, 1

</llo_original>
